<compile_context>
chip_gen: v7x
topology: tpu7x:2x2x1
jax: 0.10.0
libtpu: 0.0.40
codegen_flags: <defaults>
</compile_context>

<pallas_src>
import jax
import jax.numpy as jnp
from jax.experimental import pallas as pl
from jax.experimental.pallas import tpu as pltpu


def _round_up(n, k):
    return ((n + k - 1) // k) * k


def _vmem_capacity_bytes():
    """Generation-aware VMEM capacity (128 MiB v5e/v6e, 64 MiB per v7x TC)."""
    try:
        cap = getattr(pltpu.get_tpu_info(), "vmem_capacity_bytes", None)
        if cap:
            return int(cap)
    except Exception:
        pass
    return 64 << 20  # conservative fallback (v7x per-TensorCore)


def _footprint_bytes(tm, th, d_pad, nbuf_w):
    """Approximate VMEM residency for one grid step."""
    b_x = 2 * tm * d_pad * 2               # bf16 x tiles (double buffered)
    b_o = 2 * tm * d_pad * 4               # f32 out tiles (double buffered)
    b_acc = tm * d_pad * 4                 # f32 accumulator scratch
    b_w = nbuf_w * 2 * (d_pad * th * 2)    # two bf16 weight tiles
    b_b = nbuf_w * th * 4 + d_pad * 4      # biases
    b_h = tm * th * 4                      # live f32 up-projection intermediate
    return b_x + b_o + b_acc + b_w + b_b + b_h


def _choose_tiles(m, d_pad, hid_pad, budget):
    """Pick (tm, th).  Prefer large row tiles (amortize per-step overhead and
    weight re-streaming over the hid axis), then the largest hid chunk that
    fits the VMEM budget.  tm is capped at ~ceil(M/2) so v7x megacore
    sharding always has >= 2 row tiles when M > 8."""
    tm_cap = _round_up(max(8, -(-m // 2)), 8)
    tm_cands = [t for t in (2048, 1024, 512, 256, 128, 64, 32, 16, 8)
                if t <= tm_cap]
    if not tm_cands or tm_cands[0] != tm_cap:
        tm_cands.insert(0, tm_cap)
    # hid chunk must evenly divide the 128-padded hidden dim
    th_cands = [hid_pad] + [t for t in (4096, 2048, 1024, 512, 256, 128)
                            if t < hid_pad and hid_pad % t == 0]
    for tm in tm_cands:
        for th in th_cands:
            nbuf_w = 1 if th == hid_pad else 2
            if _footprint_bytes(tm, th, d_pad, nbuf_w) <= budget:
                return tm, th
    return 8, 128


def _mlp_kernel(x_ref, w1_ref, b1_ref, w2_ref, b2_ref, o_ref, acc_ref):
    """Fused Linear -> ReLU -> Linear over one (row tile, hid chunk) cell.

    Grid = (row_tiles, hid_chunks); hid is a reduction for the down
    projection, accumulated into an f32 VMEM scratch and written on the last
    hid step (standard init/finalize accumulator pattern)."""
    j = pl.program_id(1)

    @pl.when(j == 0)
    def _():
        acc_ref[...] = jnp.zeros_like(acc_ref)

    # up projection chunk (MXU, bf16 operands, f32 accumulation) + bias + ReLU
    h = jnp.dot(x_ref[...], w1_ref[...], preferred_element_type=jnp.float32)
    h = jnp.maximum(h + b1_ref[...], 0.0)
    # down projection chunk, accumulated over hid chunks
    acc_ref[...] += jnp.dot(h.astype(w2_ref.dtype), w2_ref[...],
                            preferred_element_type=jnp.float32)

    @pl.when(j == pl.num_programs(1) - 1)
    def _():
        # final bias; dropout is eval-mode identity
        o_ref[...] = (acc_ref[...] + b2_ref[...]).astype(o_ref.dtype)


def prepare_params(w1, b1, w2, b2):
    """Pad feature dims to multiples of 128 and cast weights to bf16 ONCE.

    Hoisted out of the per-call path so the forward pays no per-call weight
    pad/cast HBM traffic.  Weights are stored pre-transposed as [in, out]."""
    d, hid = w1.shape
    d_pad = _round_up(d, 128)
    hid_pad = _round_up(hid, 128)
    w1_p = jnp.pad(w1.astype(jnp.bfloat16), ((0, d_pad - d), (0, hid_pad - hid)))
    w2_p = jnp.pad(w2.astype(jnp.bfloat16), ((0, hid_pad - hid), (0, d_pad - d)))
    b1_p = jnp.pad(b1.astype(jnp.float32), (0, hid_pad - hid)).reshape(1, hid_pad)
    b2_p = jnp.pad(b2.astype(jnp.float32), (0, d_pad - d)).reshape(1, d_pad)
    return {"w1": w1_p, "b1": b1_p, "w2": w2_p, "b2": b2_p,
            "d": d, "hid": hid, "d_pad": d_pad, "hid_pad": hid_pad}


def vanilla_nn_forward(x, params):
    """x: [batch, seq, D] float32.  params: output of prepare_params().

    Eval-mode forward (dropout = identity).  Matmul operands are bf16 with
    f32 accumulation; expect ~1e-2 relative error vs a pure-f32 reference.
    """
    batch, seq, d = x.shape
    assert d == params["d"], "x feature dim does not match params"
    d_pad, hid_pad = params["d_pad"], params["hid_pad"]
    m = batch * seq

    cap = _vmem_capacity_bytes()
    tm, th = _choose_tiles(m, d_pad, hid_pad, int(0.80 * cap))
    m_pad = _round_up(m, tm)
    grid_m = m_pad // tm
    grid_h = hid_pad // th

    # --- x: flatten, pad only when needed, cast to bf16 --------------------
    x2 = x.reshape(m, d)
    if m_pad != m or d_pad != d:
        x2 = jnp.pad(x2, ((0, m_pad - m), (0, d_pad - d)))
    x2 = x2.astype(jnp.bfloat16)

    # --- BlockSpecs ---------------------------------------------------------
    # Weights single-buffered when fully resident (grid_h == 1); otherwise
    # default double buffering to pipeline the per-chunk weight DMAs.
    w_pipe = pl.Buffered(1) if grid_h == 1 else pl.Buffered(2)

    in_specs = [
        pl.BlockSpec((tm, d_pad), lambda i, j: (i, 0)),     # streamed x rows
        pl.BlockSpec((d_pad, th), lambda i, j: (0, j), pipeline_mode=w_pipe),
        pl.BlockSpec((1, th), lambda i, j: (0, j), pipeline_mode=w_pipe),
        pl.BlockSpec((th, d_pad), lambda i, j: (j, 0), pipeline_mode=w_pipe),
        pl.BlockSpec((1, d_pad), lambda i, j: (0, 0),
                     pipeline_mode=pl.Buffered(1)),
    ]
    out_spec = pl.BlockSpec((tm, d_pad), lambda i, j: (i, 0))

    # --- advisory cost estimate ---------------------------------------------
    flops = 4 * m_pad * d_pad * hid_pad          # two matmuls, 2*M*K*N each
    weight_bytes = 2 * (d_pad * hid_pad * 2) * (grid_m if grid_h > 1 else 1)
    bytes_accessed = (m_pad * d_pad * 2 + weight_bytes
                      + (hid_pad + d_pad) * 4 + m_pad * d_pad * 4)
    cost = pl.CostEstimate(flops=flops, transcendentals=0,
                           bytes_accessed=bytes_accessed)

    out2 = pl.pallas_call(
        _mlp_kernel,
        out_shape=jax.ShapeDtypeStruct((m_pad, d_pad), x.dtype),
        grid_spec=pltpu.PrefetchScalarGridSpec(
            num_scalar_prefetch=0,
            grid=(grid_m, grid_h),
            in_specs=in_specs,
            out_specs=out_spec,
            scratch_shapes=[pltpu.VMEM((tm, d_pad), jnp.float32)],
        ),
        compiler_params=pltpu.CompilerParams(
            dimension_semantics=("parallel", "arbitrary"),
            vmem_limit_bytes=int(0.90 * cap)),
        cost_estimate=cost,
    )(x2, params["w1"], params["b1"], params["w2"], params["b2"])

    if m_pad != m or d_pad != d:
        out2 = out2[:m, :d]
    return out2.reshape(batch, seq, d)


def init_params(key, attention_dim):
    """Deterministic init matching nn.Linear shapes (Kaiming-uniform-ish)."""
    d = attention_dim
    hid = 4 * d
    k1, k2, k3, k4 = jax.random.split(key, 4)
    bound1 = 1.0 / jnp.sqrt(d)
    bound2 = 1.0 / jnp.sqrt(hid)
    # stored pre-transposed: [in, out]
    w1 = jax.random.uniform(k1, (d, hid), jnp.float32, -bound1, bound1)
    b1 = jax.random.uniform(k2, (hid,), jnp.float32, -bound1, bound1)
    w2 = jax.random.uniform(k3, (hid, d), jnp.float32, -bound2, bound2)
    b2 = jax.random.uniform(k4, (d,), jnp.float32, -bound2, bound2)
    return w1, b1, w2, b2


if __name__ == "__main__":
    attention_dim = 32
    batch, seq = 2, 8

    key = jax.random.PRNGKey(0)
    kx, kp = jax.random.split(key)

    x = jax.random.normal(kx, (batch, seq, attention_dim), jnp.float32)
    w1, b1, w2, b2 = init_params(kp, attention_dim)

    # pad/cast weights once (hoisted out of the per-call path), close over
    # them so XLA constant-folds the prepared weights into the jitted fn.
    params = prepare_params(w1, b1, w2, b2)
    fwd = jax.jit(lambda xx: vanilla_nn_forward(xx, params))

    out = fwd(x)
    jax.block_until_ready(out)

    # reference in plain JAX (eval mode: dropout is identity); tolerance is
    # relaxed because the kernel's matmul operands are bf16 (f32 accumulation).
    ref = jnp.maximum(x.reshape(-1, attention_dim) @ w1 + b1, 0.0) @ w2 + b2
    ref = ref.reshape(batch, seq, attention_dim)
    assert out.shape == (batch, seq, attention_dim)
    assert jnp.allclose(out, ref, atol=5e-2, rtol=5e-2), (
        "max abs err = %f" % float(jnp.max(jnp.abs(out - ref))))

    print("KERNEL_OK")
</pallas_src>

<mosaic_0001>
module attributes {stable_mosaic.version = 11 : i64} {
  func.func @_mlp_kernel(%arg0: i32, %arg1: i32, %arg2: memref<8x128xbf16, #tpu.memory_space<vmem>>, %arg3: memref<128x128xbf16, #tpu.memory_space<vmem>>, %arg4: memref<1x128xf32, #tpu.memory_space<vmem>>, %arg5: memref<128x128xbf16, #tpu.memory_space<vmem>>, %arg6: memref<1x128xf32, #tpu.memory_space<vmem>>, %arg7: memref<8x128xf32, #tpu.memory_space<vmem>>, %arg8: memref<8x128xf32, #tpu.memory_space<vmem>>) attributes {dimension_semantics = [#tpu.dimension_semantics<parallel>, #tpu.dimension_semantics<arbitrary>], iteration_bounds = array<i64: 2, 1>, scalar_prefetch = 0 : i64, scratch_operands = 1 : i64, tpu.core_type = #tpu.core_type<tc>, window_params = [{transform_indices = @transform_0, window_bounds = array<i64: 8, 128>}, {pipeline_mode = #tpu.pipeline_mode<synchronous>, transform_indices = @transform_1, window_bounds = array<i64: 128, 128>}, {pipeline_mode = #tpu.pipeline_mode<synchronous>, transform_indices = @transform_2, window_bounds = array<i64: 1, 128>}, {pipeline_mode = #tpu.pipeline_mode<synchronous>, transform_indices = @transform_3, window_bounds = array<i64: 128, 128>}, {pipeline_mode = #tpu.pipeline_mode<synchronous>, transform_indices = @transform_4, window_bounds = array<i64: 1, 128>}, {transform_indices = @transform_5, window_bounds = array<i64: 8, 128>}]} {
    %c0_i32 = arith.constant 0 : i32
    %0 = arith.cmpi eq, %arg1, %c0_i32 : i32
    %1 = arith.extui %0 : i1 to i32
    %c0_i32_0 = arith.constant 0 : i32
    %2 = arith.cmpi ne, %1, %c0_i32_0 : i32
    scf.if %2 {
      %cst_16 = arith.constant 0.000000e+00 : f32
      %20 = vector.broadcast %cst_16 : f32 to vector<8x128xf32>
      %c0_17 = arith.constant 0 : index
      %c0_18 = arith.constant 0 : index
      %21 = vector.load %arg8[%c0_17, %c0_18] : memref<8x128xf32, #tpu.memory_space<vmem>>, vector<8x128xf32>
      tpu.vector_store %arg8[%c0_17, %c0_18], %20 {strides = array<i32>} : memref<8x128xf32, #tpu.memory_space<vmem>>, vector<8x128xf32>,
    } else {
    }
    %c0 = arith.constant 0 : index
    %c0_1 = arith.constant 0 : index
    %3 = vector.load %arg2[%c0, %c0_1] : memref<8x128xbf16, #tpu.memory_space<vmem>>, vector<8x128xbf16>
    %c0_2 = arith.constant 0 : index
    %c0_3 = arith.constant 0 : index
    %4 = vector.load %arg3[%c0_2, %c0_3] : memref<128x128xbf16, #tpu.memory_space<vmem>>, vector<128x128xbf16>
    %cst = arith.constant dense<0.000000e+00> : vector<8x128xf32>
    %5 = tpu.matmul %3, %4, %cst {dimension_numbers = #tpu.dot_dimension_numbers<[1], [0], [0], [1], [0, 0, 1, 1], [], []>} : vector<8x128xbf16>, vector<128x128xbf16>, vector<8x128xf32> -> vector<8x128xf32>
    %c0_4 = arith.constant 0 : index
    %c0_5 = arith.constant 0 : index
    %6 = vector.load %arg4[%c0_4, %c0_5] : memref<1x128xf32, #tpu.memory_space<vmem>>, vector<1x128xf32>
    %7 = vector.broadcast %6 : vector<1x128xf32> to vector<8x128xf32>
    %8 = arith.addf %5, %7 : vector<8x128xf32>
    %cst_6 = arith.constant 0.000000e+00 : f32
    %9 = vector.broadcast %cst_6 : f32 to vector<8x128xf32>
    %10 = arith.maximumf %8, %9 : vector<8x128xf32>
    %c0_7 = arith.constant 0 : index
    %c0_8 = arith.constant 0 : index
    %11 = vector.load %arg8[%c0_7, %c0_8] : memref<8x128xf32, #tpu.memory_space<vmem>>, vector<8x128xf32>
    %12 = arith.truncf %10 : vector<8x128xf32> to vector<8x128xbf16>
    %c0_9 = arith.constant 0 : index
    %c0_10 = arith.constant 0 : index
    %13 = vector.load %arg5[%c0_9, %c0_10] : memref<128x128xbf16, #tpu.memory_space<vmem>>, vector<128x128xbf16>
    %cst_11 = arith.constant dense<0.000000e+00> : vector<8x128xf32>
    %14 = tpu.matmul %12, %13, %cst_11 {dimension_numbers = #tpu.dot_dimension_numbers<[1], [0], [0], [1], [0, 0, 1, 1], [], []>} : vector<8x128xbf16>, vector<128x128xbf16>, vector<8x128xf32> -> vector<8x128xf32>
    %15 = arith.addf %11, %14 : vector<8x128xf32>
    %c0_12 = arith.constant 0 : index
    %c0_13 = arith.constant 0 : index
    %16 = vector.load %arg8[%c0_12, %c0_13] : memref<8x128xf32, #tpu.memory_space<vmem>>, vector<8x128xf32>
    tpu.vector_store %arg8[%c0_12, %c0_13], %15 {strides = array<i32>} : memref<8x128xf32, #tpu.memory_space<vmem>>, vector<8x128xf32>,
    %c0_i32_14 = arith.constant 0 : i32
    %17 = arith.cmpi eq, %arg1, %c0_i32_14 : i32
    %18 = arith.extui %17 : i1 to i32
    %c0_i32_15 = arith.constant 0 : i32
    %19 = arith.cmpi ne, %18, %c0_i32_15 : i32
    scf.if %19 {
      %c0_16 = arith.constant 0 : index
      %c0_17 = arith.constant 0 : index
      %20 = vector.load %arg8[%c0_16, %c0_17] : memref<8x128xf32, #tpu.memory_space<vmem>>, vector<8x128xf32>
      %c0_18 = arith.constant 0 : index
      %c0_19 = arith.constant 0 : index
      %21 = vector.load %arg6[%c0_18, %c0_19] : memref<1x128xf32, #tpu.memory_space<vmem>>, vector<1x128xf32>
      %22 = vector.broadcast %21 : vector<1x128xf32> to vector<8x128xf32>
      %23 = arith.addf %20, %22 : vector<8x128xf32>
      %c0_20 = arith.constant 0 : index
      %c0_21 = arith.constant 0 : index
      %24 = vector.load %arg7[%c0_20, %c0_21] : memref<8x128xf32, #tpu.memory_space<vmem>>, vector<8x128xf32>
      tpu.vector_store %arg7[%c0_20, %c0_21], %23 {strides = array<i32>} : memref<8x128xf32, #tpu.memory_space<vmem>>, vector<8x128xf32>,
    } else {
    }
    return
  }
  func.func @transform_0(%arg0: i32, %arg1: i32) -> (i32, i32) {
    %c0_i32 = arith.constant 0 : i32
    %c0_i32_0 = arith.constant 0 : i32
    return %arg0, %c0_i32 : i32, i32
  }
  func.func @transform_1(%arg0: i32, %arg1: i32) -> (i32, i32) {
    %c0_i32 = arith.constant 0 : i32
    %c0_i32_0 = arith.constant 0 : i32
    return %c0_i32, %arg1 : i32, i32
  }
  func.func @transform_2(%arg0: i32, %arg1: i32) -> (i32, i32) {
    %c0_i32 = arith.constant 0 : i32
    %c0_i32_0 = arith.constant 0 : i32
    return %c0_i32, %arg1 : i32, i32
  }
  func.func @transform_3(%arg0: i32, %arg1: i32) -> (i32, i32) {
    %c0_i32 = arith.constant 0 : i32
    %c0_i32_0 = arith.constant 0 : i32
    return %arg1, %c0_i32 : i32, i32
  }
  func.func @transform_4(%arg0: i32, %arg1: i32) -> (i32, i32) {
    %c0_i32 = arith.constant 0 : i32
    %c0_i32_0 = arith.constant 0 : i32
    %c0_i32_1 = arith.constant 0 : i32
    return %c0_i32, %c0_i32_0 : i32, i32
  }
  func.func @transform_5(%arg0: i32, %arg1: i32) -> (i32, i32) {
    %c0_i32 = arith.constant 0 : i32
    %c0_i32_0 = arith.constant 0 : i32
    return %arg0, %c0_i32 : i32, i32
  }
}

</mosaic_0001>

<llo_original>
// kernel: _lambda_.1
$region0: #{_lambda_.1}
  #allocation0 [shape = 'u32[]', space=smem, size = 0x4, offset = 0x4, fixed_abs, tag = 'smem constant byte address 0x4 - core index']
  #allocation1 [shape = 'u32[144,128]{1,0:T(1,128)}', space=vmem, size = 0x12000, scoped, tag = 'internal scratch']
  #allocation2 [shape = 'f32[8,128]{1,0:T(8,128)}', space=vmem, size = 0x1000, scoped, tag = 'scratch operand']
  %s0 = inlined_call_operand.vmem [shape: bf16[16,128], index: 0, kind: input, shape index: {}]
  %s1 = inlined_call_operand.hbm [shape: bf16[128,128], index: 1, kind: input, shape index: {}]
  %s2 = inlined_call_operand.vmem [shape: f32[1,128], index: 2, kind: input, shape index: {}]
  %s3 = inlined_call_operand.vmem [shape: bf16[128,128], index: 3, kind: input, shape index: {}]
  %s4 = inlined_call_operand.vmem [shape: f32[1,128], index: 4, kind: input, shape index: {}]
  %s5 = inlined_call_operand.vmem [shape: f32[16,128], index: 5, kind: output, shape index: {}]
  %s6 = sld [smem:[#allocation0]]
  $region65: #{_lambda_.1} parent=0
    _
  %s8 = ssub.s32 1, %s6
  %s9 = scalar_select 0, %s8, %s6
  $region1: #{_lambda_.1} parent=0
    #allocation3 [shape = 'u8[32768]{0}', space=vmem, size = 0x8000, scoped, tag = 'input window, operand 1, single buffered']
    #allocation4 [shape = 's32[2]{0}', space=sflag, size = 0x8, scoped, tag = 'scoped memory for _lambda_.1']
    %10 = vsyncpa [#allocation4], 0
    loop: start=0, step=1, limit=4
    $region2: #{_lambda_.1} parent=1 // loop_pre_header
      _
    $region3: #{_lambda_.1} parent=1 // loop_header
      %s12 = sphi 0, %s16
      %p13 = scmp.ge.s32.totalorder %s12, 4
      %s19 = sphi 0, %s31
      %s20 = sphi 0, %s27
      %s21 = sphi 0, %s19
      %s22 = sphi 0, %s20
      %s23 = sphi 0, %s21
      %s24 = sphi 0, %s22
      %s34 = sphi 0, %s36
      %s37 = sphi 0, %s34
      %s38 = sphi 0, %s37
      %s54 = sphi 0, %s38
      %s60 = sphi 0, %s62
      %s63 = sphi 0, %s60
      %s64 = sphi 0, %s63
      %s80 = sphi 0, %s64
      %s86 = sphi 0, %s88
      %s89 = sphi 0, %s86
      %s90 = sphi 0, %s89
      %s106 = sphi 0, %s90
      %s112 = sphi 0, %s114
      %s115 = sphi 0, %s112
      %s116 = sphi 0, %s115
      %s132 = sphi 0, %s116
      %s136 = sphi 0, %s136
      %s138 = sphi 0, %s136
      %s139 = sphi 0, %s138
      %s153 = sphi 0, %s139
      %s159 = sphi 0, %s161
      %s162 = sphi 0, %s159
      %s163 = sphi 0, %s162
      %s179 = sphi 0, %s163
    $region4: #{_lambda_.1} parent=1 // loop_header_branch
      %15 = sbr.rel (%p13) target = $region8
    $region5: #{_lambda_.1} parent=1 // loop_body
      %s17 = ssub.s32 %s12, 1
      %s18 = ssub.s32 %s12, 2
      %s25 = sadd.s32 1, %s20
      %p26 = scmp.ge.s32.totalorder %s25, 1
      %s27 = scalar_select %p26, 0, %s25
      %s28 = sadd.s32 1, %s19
      %s29 = scalar_select %p26, %s28, %s19
      %p30 = scmp.ge.s32.totalorder %s29, 2
      %s31 = scalar_select %p30, 0, %s29
      %s32 = ssub.s32 %s19, %s31
      %p33 = scmp.eq.s32.totalorder %s32, 0
      %s35 = sadd.s32 %s34, 1
      %s36 = scalar_select %p33, %s34, %s35
      %p39 = pneg %p33
      %p40 = scmp.eq.s32.totalorder %s12, 1
      %p41 = por %p39, %p40
      %p42 = scmp.ne.s32.totalorder %s34, %s37
      %p43 = scmp.eq.s32.totalorder %s12, 0
      %p44 = por %p42, %p43
      %p45 = scmp.ne.s32.totalorder %s34, %s37
      %p46 = scmp.eq.s32.totalorder %s17, 1
      %p47 = por %p45, %p46
      %p48 = scmp.ne.s32.totalorder %s37, %s38
      %p49 = scmp.eq.s32.totalorder %s17, 0
      %p50 = por %p48, %p49
      %p51 = scmp.ne.s32.totalorder %s37, %s38
      %p52 = scmp.eq.s32.totalorder %s18, 1
      %p53 = por %p51, %p52
      %p55 = scmp.ne.s32.totalorder %s38, %s54
      %p56 = scmp.eq.s32.totalorder %s18, 0
      %p57 = por %p55, %p56
      %s58 = ssub.s32 %s20, %s27
      %p59 = scmp.eq.s32.totalorder %s58, 0
      %s61 = sadd.s32 %s60, 1
      %s62 = scalar_select %p59, %s60, %s61
      %p65 = pneg %p59
      %p66 = scmp.eq.s32.totalorder %s12, 1
      %p67 = por %p65, %p66
      %p68 = scmp.ne.s32.totalorder %s60, %s63
      %p69 = scmp.eq.s32.totalorder %s12, 0
      %p70 = por %p68, %p69
      %p71 = scmp.ne.s32.totalorder %s60, %s63
      %p72 = scmp.eq.s32.totalorder %s17, 1
      %p73 = por %p71, %p72
      %p74 = scmp.ne.s32.totalorder %s63, %s64
      %p75 = scmp.eq.s32.totalorder %s17, 0
      %p76 = por %p74, %p75
      %p77 = scmp.ne.s32.totalorder %s63, %s64
      %p78 = scmp.eq.s32.totalorder %s18, 1
      %p79 = por %p77, %p78
      %p81 = scmp.ne.s32.totalorder %s64, %s80
      %p82 = scmp.eq.s32.totalorder %s18, 0
      %p83 = por %p81, %p82
      %s84 = ssub.s32 %s20, %s27
      %p85 = scmp.eq.s32.totalorder %s84, 0
      %s87 = sadd.s32 %s86, 1
      %s88 = scalar_select %p85, %s86, %s87
      %p91 = pneg %p85
      %p92 = scmp.eq.s32.totalorder %s12, 1
      %p93 = por %p91, %p92
      %p94 = scmp.ne.s32.totalorder %s86, %s89
      %p95 = scmp.eq.s32.totalorder %s12, 0
      %p96 = por %p94, %p95
      %p97 = scmp.ne.s32.totalorder %s86, %s89
      %p98 = scmp.eq.s32.totalorder %s17, 1
      %p99 = por %p97, %p98
      %p100 = scmp.ne.s32.totalorder %s89, %s90
      %p101 = scmp.eq.s32.totalorder %s17, 0
      %p102 = por %p100, %p101
      %p103 = scmp.ne.s32.totalorder %s89, %s90
      %p104 = scmp.eq.s32.totalorder %s18, 1
      %p105 = por %p103, %p104
      %p107 = scmp.ne.s32.totalorder %s90, %s106
      %p108 = scmp.eq.s32.totalorder %s18, 0
      %p109 = por %p107, %p108
      %s110 = ssub.s32 %s20, %s27
      %p111 = scmp.eq.s32.totalorder %s110, 0
      %s113 = sadd.s32 %s112, 1
      %s114 = scalar_select %p111, %s112, %s113
      %p117 = pneg %p111
      %p118 = scmp.eq.s32.totalorder %s12, 1
      %p119 = por %p117, %p118
      %p120 = scmp.ne.s32.totalorder %s112, %s115
      %p121 = scmp.eq.s32.totalorder %s12, 0
      %p122 = por %p120, %p121
      %p123 = scmp.ne.s32.totalorder %s112, %s115
      %p124 = scmp.eq.s32.totalorder %s17, 1
      %p125 = por %p123, %p124
      %p126 = scmp.ne.s32.totalorder %s115, %s116
      %p127 = scmp.eq.s32.totalorder %s17, 0
      %p128 = por %p126, %p127
      %p129 = scmp.ne.s32.totalorder %s115, %s116
      %p130 = scmp.eq.s32.totalorder %s18, 1
      %p131 = por %p129, %p130
      %p133 = scmp.ne.s32.totalorder %s116, %s132
      %p134 = scmp.eq.s32.totalorder %s18, 0
      %p135 = por %p133, %p134
      %s137 = sadd.s32 %s136, 1
      %p140 = scmp.eq.s32.totalorder %s12, 1
      %p141 = scmp.ne.s32.totalorder %s136, %s138
      %p142 = scmp.eq.s32.totalorder %s12, 0
      %p143 = por %p141, %p142
      %p144 = scmp.ne.s32.totalorder %s136, %s138
      %p145 = scmp.eq.s32.totalorder %s17, 1
      %p146 = por %p144, %p145
      %p147 = scmp.ne.s32.totalorder %s138, %s139
      %p148 = scmp.eq.s32.totalorder %s17, 0
      %p149 = por %p147, %p148
      %p150 = scmp.ne.s32.totalorder %s138, %s139
      %p151 = scmp.eq.s32.totalorder %s18, 1
      %p152 = por %p150, %p151
      %p154 = scmp.ne.s32.totalorder %s139, %s153
      %p155 = scmp.eq.s32.totalorder %s18, 0
      %p156 = por %p154, %p155
      %s157 = ssub.s32 %s19, %s31
      %p158 = scmp.eq.s32.totalorder %s157, 0
      %s160 = sadd.s32 %s159, 1
      %s161 = scalar_select %p158, %s159, %s160
      %p164 = pneg %p158
      %p165 = scmp.eq.s32.totalorder %s12, 1
      %p166 = por %p164, %p165
      %p167 = scmp.ne.s32.totalorder %s159, %s162
      %p168 = scmp.eq.s32.totalorder %s12, 0
      %p169 = por %p167, %p168
      %p170 = scmp.ne.s32.totalorder %s159, %s162
      %p171 = scmp.eq.s32.totalorder %s17, 1
      %p172 = por %p170, %p171
      %p173 = scmp.ne.s32.totalorder %s162, %s163
      %p174 = scmp.eq.s32.totalorder %s17, 0
      %p175 = por %p173, %p174
      %p176 = scmp.ne.s32.totalorder %s162, %s163
      %p177 = scmp.eq.s32.totalorder %s18, 1
      %p178 = por %p176, %p177
      %p180 = scmp.ne.s32.totalorder %s163, %s179
      %p181 = scmp.eq.s32.totalorder %s18, 0
      %p182 = por %p180, %p181
      %p183 = scmp.le.s32.totalorder 1, %s12
      %p184 = scmp.lt.s32.totalorder %s12, 3
      %p185 = pnand %p183, %p184
      %p186 = pneg %p185
      // Predicated region
      $region9: #{_lambda_.1} parent=5 // pred_check
        _
      $region10: #{_lambda_.1} parent=5 // pred_check_branch
        %188 = sbr.rel (%p185) target = $region12
      $region11: #{_lambda_.1} parent=5 // pred_region
        %s189 = ssub.s32 %s12, 1
        // Predicated region
        $region13: #{_lambda_.1} parent=11 // pred_check
          %p190 = pneg %p76
        $region14: #{_lambda_.1} parent=11 // pred_check_branch
          %192 = sbr.rel (%p190) target = $region16
        $region15: #{_lambda_.1} parent=11 // pred_region
          %s194 = ssub.s32 1024, 1024
          %195 = vsyncadd [#allocation4], %s194
          %s196 = smul.addr %s22, 64
          %s197 = scalar_lea.hbm %s1, %s196
          %s198 = sshll.u32 [#allocation3], 4
          %s199 = int_to_ptr.vmem [resolvable:$true] %s198
          %204 = dma.hbm_to_vmem [thread:$0]  %s197, 1024, %s199, [#allocation4], 64, 64, 4
        $region16: #{_lambda_.1} parent=11 // pred_fallthru
          _
        // Predicated region
        $region17: #{_lambda_.1} parent=11 // pred_check
          %p205 = pneg %p102
        $region18: #{_lambda_.1} parent=11 // pred_check_branch
          %207 = sbr.rel (%p205) target = $region20
        $region19: #{_lambda_.1} parent=11 // pred_region
          %p208 = scmp.lt.s32.totalorder %s22, 0
          %s209 = scalar_select %p208, %s22, 0
          %s210 = scalar_lea.vmem %s2, %s209
        $region20: #{_lambda_.1} parent=11 // pred_fallthru
          _
        // Predicated region
        $region21: #{_lambda_.1} parent=11 // pred_check
          %p211 = pneg %p128
        $region22: #{_lambda_.1} parent=11 // pred_check_branch
          %213 = sbr.rel (%p211) target = $region24
        $region23: #{_lambda_.1} parent=11 // pred_region
          %s214 = smul.u32 16, %s22
          %p215 = scmp.lt.s32.totalorder %s214, 15
          %s216 = scalar_select %p215, %s214, 15
          %s217 = smul.addr %s216, 4
          %s218 = scalar_lea.vmem %s3, %s217
          %s219 = smul.u32 16, %s22
        $region24: #{_lambda_.1} parent=11 // pred_fallthru
          _
        // Predicated region
        $region25: #{_lambda_.1} parent=11 // pred_check
          %p220 = pneg %p149
        $region26: #{_lambda_.1} parent=11 // pred_check_branch
          %222 = sbr.rel (%p220) target = $region28
        $region27: #{_lambda_.1} parent=11 // pred_region
          _
        $region28: #{_lambda_.1} parent=11 // pred_fallthru
          _
      $region12: #{_lambda_.1} parent=5 // pred_fallthru
        _
      %p223 = scmp.lt.s32.totalorder %s12, 2
      // Predicated region
      $region29: #{_lambda_.1} parent=5 // pred_check
        %p224 = pneg %p223
      $region30: #{_lambda_.1} parent=5 // pred_check_branch
        %226 = sbr.rel (%p224) target = $region32
      $region31: #{_lambda_.1} parent=5 // pred_region
        // Predicated region
        $region33: #{_lambda_.1} parent=31 // pred_check
          %p227 = pneg %p44
        $region34: #{_lambda_.1} parent=31 // pred_check_branch
          %229 = sbr.rel (%p227) target = $region36
        $region35: #{_lambda_.1} parent=31 // pred_region
          %p230 = scmp.lt.s32.totalorder %s19, 1
          %s231 = scalar_select %p230, %s19, 1
          %s232 = smul.addr %s231, 4
          %s233 = scalar_lea.vmem %s0, %s232
        $region36: #{_lambda_.1} parent=31 // pred_fallthru
          _
      $region32: #{_lambda_.1} parent=5 // pred_fallthru
        _
      %p234 = scmp.le.s32.totalorder 1, %s12
      %p235 = scmp.lt.s32.totalorder %s12, 3
      %p236 = pnand %p234, %p235
      %p237 = pneg %p236
      // Predicated region
      $region37: #{_lambda_.1} parent=5 // pred_check
        _
      $region38: #{_lambda_.1} parent=5 // pred_check_branch
        %239 = sbr.rel (%p236) target = $region40
      $region39: #{_lambda_.1} parent=5 // pred_region
        %s240 = ssub.s32 %s12, 1
        // Predicated region
        $region41: #{_lambda_.1} parent=39 // pred_check
          %p241 = pneg %p76
        $region42: #{_lambda_.1} parent=39 // pred_check_branch
          %243 = sbr.rel (%p241) target = $region44
        $region43: #{_lambda_.1} parent=39 // pred_region
          %244 = dma.done [#allocation4], 1024
        $region44: #{_lambda_.1} parent=39 // pred_fallthru
          _
        %p245 = scmp.lt.s32.totalorder %s21, 1
        %s246 = scalar_select %p245, %s21, 1
        %s247 = smul.addr %s246, 4
        %s248 = scalar_lea.vmem %s0, %s247
        %p249 = pneg %p50
        %p250 = pneg %p47
        %p251 = pneg %p76
        %p252 = pneg %p73
        %p253 = scmp.lt.s32.totalorder %s22, 0
        %s254 = scalar_select %p253, %s22, 0
        %s255 = scalar_lea.vmem %s2, %s254
        %p256 = pneg %p102
        %p257 = pneg %p99
        %s258 = smul.u32 16, %s22
        %p259 = scmp.lt.s32.totalorder %s258, 15
        %s260 = scalar_select %p259, %s258, 15
        %s261 = smul.addr %s260, 4
        %s262 = scalar_lea.vmem %s3, %s261
        %p263 = pneg %p128
        %p264 = pneg %p125
        %p265 = pneg %p149
        %p266 = pneg %p146
        %p267 = pneg %p175
        %p268 = pneg %p172
        %p269 = scmp.lt.s32.totalorder %s21, 1
        %s270 = scalar_select %p269, %s21, 1
        %s271 = smul.addr %s270, 8
        %s272 = scalar_lea.vmem %s5, %s271
        %p273 = scmp.lt.s32.totalorder %s21, 1
        %s274 = scalar_select %p273, %s21, 1
        %s275 = smul.addr %s274, 4
        %s276 = scalar_lea.vmem %s0, %s275
        %p277 = scmp.lt.s32.totalorder %s22, 0
        %s278 = scalar_select %p277, %s22, 0
        %s279 = scalar_lea.vmem %s2, %s278
        %s280 = smul.u32 16, %s22
        %p281 = scmp.lt.s32.totalorder %s280, 15
        %s282 = scalar_select %p281, %s280, 15
        %s283 = smul.addr %s282, 4
        %s284 = scalar_lea.vmem %s3, %s283
        %s285 = smul.u32 16, %s22
        %p286 = scmp.lt.s32.totalorder %s21, 1
        %s287 = scalar_select %p286, %s21, 1
        %s288 = smul.addr %s287, 8
        %s289 = scalar_lea.vmem %s5, %s288
        %p291 = scmp.eq.s32.totalorder %s22, 0
        // Predicated region
        $region45: #{_lambda_.1} parent=39 // pred_check
          %p292 = pneg %p291
        $region46: #{_lambda_.1} parent=39 // pred_check_branch
          %294 = sbr.rel (%p292) target = $region48
        $region47: #{_lambda_.1} parent=39 // pred_region
          %295 = vst [vmem:[#allocation2] sm:$0xff] 0.0
        $region48: #{_lambda_.1} parent=39 // pred_fallthru
          _
        %v296 = vld [vmem:[%s276] sm:$0xf]
        %v297 = vld [vmem:[#allocation3] sm:$0xf]
        %v298 = vld [vmem:[#allocation3 + $0x4] sm:$0xf]
        %v299 = vld [vmem:[#allocation3 + $0x8] sm:$0xf]
        %v300 = vld [vmem:[#allocation3 + $0xc] sm:$0xf]
        %v301 = vld [vmem:[#allocation3 + $0x10] sm:$0xf]
        %v302 = vld [vmem:[#allocation3 + $0x14] sm:$0xf]
        %v303 = vld [vmem:[#allocation3 + $0x18] sm:$0xf]
        %v304 = vld [vmem:[#allocation3 + $0x1c] sm:$0xf]
        %v305 = vld [vmem:[#allocation3 + $0x20] sm:$0xf]
        %v306 = vld [vmem:[#allocation3 + $0x24] sm:$0xf]
        %v307 = vld [vmem:[#allocation3 + $0x28] sm:$0xf]
        %v308 = vld [vmem:[#allocation3 + $0x2c] sm:$0xf]
        %v309 = vld [vmem:[#allocation3 + $0x30] sm:$0xf]
        %v310 = vld [vmem:[#allocation3 + $0x34] sm:$0xf]
        %v311 = vld [vmem:[#allocation3 + $0x38] sm:$0xf]
        %v312 = vld [vmem:[#allocation3 + $0x3c] sm:$0xf]
        %v313 = vld [vmem:[%s279] sm:$0x1]
        %v315 = vlaneseq
        %v316 = vshrl.u32 %v315, 7
        %v317 = vsub.s32 0, %v316
        %v318 = vrot.slane %v313, %v317
        %v336 = vunpack.c.l.b16 %v297
        %v337 = vunpack.c.l.b16 %v298
        %v338 = vunpack.c.l.b16 %v299
        %v339 = vunpack.c.l.b16 %v300
        %v340 = vunpack.c.l.b16 %v301
        %v341 = vunpack.c.l.b16 %v302
        %v342 = vunpack.c.l.b16 %v303
        %v343 = vunpack.c.l.b16 %v304
        %v344 = vunpack.c.l.b16 %v305
        %v345 = vunpack.c.l.b16 %v306
        %v346 = vunpack.c.l.b16 %v307
        %v347 = vunpack.c.l.b16 %v308
        %v348 = vunpack.c.l.b16 %v309
        %v349 = vunpack.c.l.b16 %v310
        %v350 = vunpack.c.l.b16 %v311
        %v351 = vunpack.c.l.b16 %v312
        %v352 = vpack.c.b16 %v337, %v336
        %v353 = vpack.c.b16 %v339, %v338
        %v354 = vpack.c.b16 %v341, %v340
        %v355 = vpack.c.b16 %v343, %v342
        %v356 = vpack.c.b16 %v345, %v344
        %v357 = vpack.c.b16 %v347, %v346
        %v358 = vpack.c.b16 %v349, %v348
        %v359 = vpack.c.b16 %v351, %v350
        %368 = vmatprep.subr.bf16.mxu0 0
        %369 = vmatpush1.bf16.msra.mxu0 %v352
        %370 = vmatprep.subr.bf16.mxu0 0
        %371 = vmatpush1.bf16.msra.mxu0 %v353
        %372 = vmatprep.subr.bf16.mxu0 0
        %373 = vmatpush1.bf16.msra.mxu0 %v354
        %374 = vmatprep.subr.bf16.mxu0 0
        %375 = vmatpush1.bf16.msra.mxu0 %v355
        %376 = vmatprep.subr.bf16.mxu0 0
        %377 = vmatpush1.bf16.msra.mxu0 %v356
        %378 = vmatprep.subr.bf16.mxu0 0
        %379 = vmatpush1.bf16.msra.mxu0 %v357
        %380 = vmatprep.subr.bf16.mxu0 0
        %381 = vmatpush1.bf16.msra.mxu0 %v358
        %382 = vmatprep.subr.bf16.mxu0 0
        %383 = vmatpush1.bf16.msra.mxu0 %v359
        %384 = vmatprep.subr.bf16.mxu0 0
        %385 = vmatpush1.bf16.msra.mxu0 0
        %386 = vmatprep.subr.bf16.mxu0 0
        %387 = vmatpush1.bf16.msra.mxu0 0
        %388 = vmatprep.subr.bf16.mxu0 0
        %389 = vmatpush1.bf16.msra.mxu0 0
        %390 = vmatprep.subr.bf16.mxu0 0
        %391 = vmatpush1.bf16.msra.mxu0 0
        %392 = vmatprep.subr.bf16.mxu0 0
        %393 = vmatpush1.bf16.msra.mxu0 0
        %394 = vmatprep.subr.bf16.mxu0 0
        %395 = vmatpush1.bf16.msra.mxu0 0
        %396 = vmatprep.subr.bf16.mxu0 0
        %397 = vmatpush1.bf16.msra.mxu0 0
        %398 = vmatprep.subr.bf16.mxu0 0
        %399 = vmatpush1.bf16.msra.mxu0 0
        %400 = vmatprep.mubr.bf16.mxu0 0
        %401 = vmatmul.mubr.bf16.gmra.mrb[0].mxu0 %v296
        %v402 = vpop.f32.mrb[0].mxu0
        %v403 = vadd.f32 %v318, %v402
        %v404 = vpop.f32.mrb[0].mxu0
        %v405 = vpop.f32.mrb[0].mxu0
        %v406 = vpop.f32.mrb[0].mxu0
        %407 = vdwg.mxu0
        %v408 = vmax.f32 %v403, 0.0
        %v409 = vld [vmem:[#allocation2] sm:$0xff]
        %v410 = vpack.c.bf16 %v408, %v408
        %v411 = vld [vmem:[%s284] sm:$0xf]
        %v412 = vld [vmem:[%s284 + $0x4] sm:$0xf]
        %v413 = vld [vmem:[%s284 + $0x8] sm:$0xf]
        %v414 = vld [vmem:[%s284 + $0xc] sm:$0xf]
        %v415 = vld [vmem:[%s284 + $0x10] sm:$0xf]
        %v416 = vld [vmem:[%s284 + $0x14] sm:$0xf]
        %v417 = vld [vmem:[%s284 + $0x18] sm:$0xf]
        %v418 = vld [vmem:[%s284 + $0x1c] sm:$0xf]
        %v419 = vld [vmem:[%s284 + $0x20] sm:$0xf]
        %v420 = vld [vmem:[%s284 + $0x24] sm:$0xf]
        %v421 = vld [vmem:[%s284 + $0x28] sm:$0xf]
        %v422 = vld [vmem:[%s284 + $0x2c] sm:$0xf]
        %v423 = vld [vmem:[%s284 + $0x30] sm:$0xf]
        %v424 = vld [vmem:[%s284 + $0x34] sm:$0xf]
        %v425 = vld [vmem:[%s284 + $0x38] sm:$0xf]
        %v426 = vld [vmem:[%s284 + $0x3c] sm:$0xf]
        %v443 = vunpack.c.l.b16 %v411
        %v444 = vunpack.c.l.b16 %v412
        %v445 = vunpack.c.l.b16 %v413
        %v446 = vunpack.c.l.b16 %v414
        %v447 = vunpack.c.l.b16 %v415
        %v448 = vunpack.c.l.b16 %v416
        %v449 = vunpack.c.l.b16 %v417
        %v450 = vunpack.c.l.b16 %v418
        %v451 = vunpack.c.l.b16 %v419
        %v452 = vunpack.c.l.b16 %v420
        %v453 = vunpack.c.l.b16 %v421
        %v454 = vunpack.c.l.b16 %v422
        %v455 = vunpack.c.l.b16 %v423
        %v456 = vunpack.c.l.b16 %v424
        %v457 = vunpack.c.l.b16 %v425
        %v458 = vunpack.c.l.b16 %v426
        %v459 = vpack.c.b16 %v444, %v443
        %v460 = vpack.c.b16 %v446, %v445
        %v461 = vpack.c.b16 %v448, %v447
        %v462 = vpack.c.b16 %v450, %v449
        %v463 = vpack.c.b16 %v452, %v451
        %v464 = vpack.c.b16 %v454, %v453
        %v465 = vpack.c.b16 %v456, %v455
        %v466 = vpack.c.b16 %v458, %v457
        %475 = vmatprep.subr.bf16.mxu0 0
        %476 = vmatpush1.bf16.msra.mxu0 %v459
        %477 = vmatprep.subr.bf16.mxu0 0
        %478 = vmatpush1.bf16.msra.mxu0 %v460
        %479 = vmatprep.subr.bf16.mxu0 0
        %480 = vmatpush1.bf16.msra.mxu0 %v461
        %481 = vmatprep.subr.bf16.mxu0 0
        %482 = vmatpush1.bf16.msra.mxu0 %v462
        %483 = vmatprep.subr.bf16.mxu0 0
        %484 = vmatpush1.bf16.msra.mxu0 %v463
        %485 = vmatprep.subr.bf16.mxu0 0
        %486 = vmatpush1.bf16.msra.mxu0 %v464
        %487 = vmatprep.subr.bf16.mxu0 0
        %488 = vmatpush1.bf16.msra.mxu0 %v465
        %489 = vmatprep.subr.bf16.mxu0 0
        %490 = vmatpush1.bf16.msra.mxu0 %v466
        %491 = vmatprep.subr.bf16.mxu0 0
        %492 = vmatpush1.bf16.msra.mxu0 0
        %493 = vmatprep.subr.bf16.mxu0 0
        %494 = vmatpush1.bf16.msra.mxu0 0
        %495 = vmatprep.subr.bf16.mxu0 0
        %496 = vmatpush1.bf16.msra.mxu0 0
        %497 = vmatprep.subr.bf16.mxu0 0
        %498 = vmatpush1.bf16.msra.mxu0 0
        %499 = vmatprep.subr.bf16.mxu0 0
        %500 = vmatpush1.bf16.msra.mxu0 0
        %501 = vmatprep.subr.bf16.mxu0 0
        %502 = vmatpush1.bf16.msra.mxu0 0
        %503 = vmatprep.subr.bf16.mxu0 0
        %504 = vmatpush1.bf16.msra.mxu0 0
        %505 = vmatprep.subr.bf16.mxu0 0
        %506 = vmatpush1.bf16.msra.mxu0 0
        %507 = vmatprep.mubr.bf16.mxu0 0
        %508 = vmatmul.mubr.bf16.gmra.mrb[0].mxu0 %v410
        %v509 = vpop.f32.mrb[0].mxu0
        %v510 = vadd.f32 0.0, %v509
        %v511 = vpop.f32.mrb[0].mxu0
        %v512 = vpop.f32.mrb[0].mxu0
        %v513 = vpop.f32.mrb[0].mxu0
        %514 = vdwg.mxu0
        %v515 = vadd.f32 %v409, %v510
        %516 = vst [vmem:[#allocation2] sm:$0xff] %v515
        // Predicated region
        $region49: #{_lambda_.1} parent=39 // pred_check
          %p517 = pneg %p291
        $region50: #{_lambda_.1} parent=39 // pred_check_branch
          %519 = sbr.rel (%p517) target = $region52
        $region51: #{_lambda_.1} parent=39 // pred_region
          %v520 = vld [vmem:[#allocation2] sm:$0xff]
          %v521 = vld [vmem:[%s4] sm:$0x1]
          %v523 = vlaneseq
          %v524 = vshrl.u32 %v523, 7
          %v525 = vsub.s32 0, %v524
          %v526 = vrot.slane %v521, %v525
          %v528 = vadd.f32 %v520, %v526
          %529 = vst [vmem:[%s289] sm:$0xff] %v528
        $region52: #{_lambda_.1} parent=39 // pred_fallthru
          _
        %p530 = scmp.lt.s32.totalorder %s21, 1
        %s531 = scalar_select %p530, %s21, 1
        %s532 = smul.addr %s531, 8
        %s533 = scalar_lea.vmem %s5, %s532
        // Predicated region
        $region53: #{_lambda_.1} parent=39 // pred_check
          %p534 = pneg %p172
        $region54: #{_lambda_.1} parent=39 // pred_check_branch
          %536 = sbr.rel (%p534) target = $region56
        $region55: #{_lambda_.1} parent=39 // pred_region
          _
        $region56: #{_lambda_.1} parent=39 // pred_fallthru
          _
      $region40: #{_lambda_.1} parent=5 // pred_fallthru
        _
      %p537 = scmp.le.s32.totalorder 2, %s12
      // Predicated region
      $region57: #{_lambda_.1} parent=5 // pred_check
        %p538 = pneg %p537
      $region58: #{_lambda_.1} parent=5 // pred_check_branch
        %540 = sbr.rel (%p538) target = $region60
      $region59: #{_lambda_.1} parent=5 // pred_region
        %s541 = ssub.s32 %s12, 2
        // Predicated region
        $region61: #{_lambda_.1} parent=59 // pred_check
          %p542 = pneg %p178
        $region62: #{_lambda_.1} parent=59 // pred_check_branch
          %544 = sbr.rel (%p542) target = $region64
        $region63: #{_lambda_.1} parent=59 // pred_region
          %p545 = scmp.lt.s32.totalorder %s23, 1
          %s546 = scalar_select %p545, %s23, 1
          %s547 = smul.addr %s546, 8
          %s548 = scalar_lea.vmem %s5, %s547
        $region64: #{_lambda_.1} parent=59 // pred_fallthru
          _
      $region60: #{_lambda_.1} parent=5 // pred_fallthru
        _
    $region6: #{_lambda_.1} parent=1 // loop_footer
      %s16 = sadd.s32 1, %s12
    $region7: #{_lambda_.1} parent=1 // loop_footer_branch
      %11 = sbr.rel target = $region3
    $region8: #{_lambda_.1} parent=1 // loop_exit
      _
    %549 = vsyncpa [#allocation4], 1
    %s550 = scalar_lea.sflag [#allocation4], 1
    %551 = vsyncpa %s550, 1

</llo_original>
